<compile_context>
chip_gen: v7x
topology: tpu7x:2x2x1
jax: 0.10.0
libtpu: 0.0.40
codegen_flags: <defaults>
</compile_context>

<pallas_src>
import functools

import jax
import jax.numpy as jnp
from jax.experimental import pallas as pl
from jax.experimental.pallas import tpu as pltpu

# --- model hyperparameters (derived exactly as in the PyTorch script) ---
sentences = ['i like cat', 'i love coffee', 'i hate milk']
sentences_list = ' '.join(sentences).split()
V = sorted(set(sentences_list))          # deterministic vocab order
V_count = len(V)                         # 7
h_n = 2
n = 3
one_hot_len = (n - 1) * V_count          # 14

LANE = 128                               # TPU lane width; pad feature dims to this


def nnlm_kernel(x_ref, hw_ref, u_ref, z_ref):
    """One batch tile: z_pad = x @ W_pad + tanh(x @ H_pad) @ U_pad (lane-dense)."""
    x = x_ref[...]                                                    # (TB, 14)
    # Fused contraction: one MXU matmul covers both x@H and x@W.
    xhw = jnp.dot(x, hw_ref[...],
                  preferred_element_type=jnp.float32)                 # (TB, 2*LANE)
    h = jnp.tanh(xhw[:, :LANE])          # cols >= h_n are tanh(0) = 0
    xw = xhw[:, LANE:]                   # cols >= V_count are 0
    # U_pad rows >= h_n and cols >= V_count are zero, so this equals tanh(x@H)@U
    # in the first V_count output columns.
    z_ref[...] = xw + jnp.dot(h, u_ref[...],
                              preferred_element_type=jnp.float32)     # (TB, LANE)


@functools.partial(jax.jit, static_argnames=("tile_b",))
def nnlm_forward(inp, H, W, U, *, tile_b=512):
    """inp: (B, n-1, V_count) one-hot float32. Returns (B, V_count) logits."""
    x = inp.reshape(-1, one_hot_len).astype(jnp.float32)   # matches torch reshape
    B = x.shape[0]

    # Adaptive batch tile: multiple of 8 (sublane constraint), capped at tile_b,
    # and no larger than the (8-rounded) batch so tiny batches aren't over-padded.
    b_rounded = max(8, -(-B // 8) * 8)
    tb = min(max(8, (tile_b // 8) * 8), b_rounded)
    num_tiles = pl.cdiv(B, tb)
    B_pad = num_tiles * tb
    x_pad = jnp.pad(x, ((0, B_pad - B), (0, 0)))            # zero rows -> zero logits

    # Zero-padded, lane-dense parameters (tiny; built once under jit).
    H_pad = jnp.zeros((one_hot_len, LANE), jnp.float32).at[:, :h_n].set(H)
    W_pad = jnp.zeros((one_hot_len, LANE), jnp.float32).at[:, :V_count].set(W)
    HW = jnp.concatenate([H_pad, W_pad], axis=1)            # (14, 2*LANE)
    U_pad = jnp.zeros((LANE, LANE), jnp.float32).at[:h_n, :V_count].set(U)

    z_pad = pl.pallas_call(
        nnlm_kernel,
        out_shape=jax.ShapeDtypeStruct((B_pad, LANE), jnp.float32),
        grid_spec=pltpu.PrefetchScalarGridSpec(
            num_scalar_prefetch=0,
            grid=(num_tiles,),
            in_specs=[
                # x: tiled over batch; last dim is the full one_hot_len (full-dim block)
                pl.BlockSpec((tb, one_hot_len), lambda i: (i, 0)),
                # fused H|W weights and padded U: tiny, constant block (stays resident)
                pl.BlockSpec((one_hot_len, 2 * LANE), lambda i: (0, 0)),
                pl.BlockSpec((LANE, LANE), lambda i: (0, 0)),
            ],
            # lane-dense (128-wide) output tile -> unmasked full-width stores
            out_specs=pl.BlockSpec((tb, LANE), lambda i: (i, 0)),
        ),
        compiler_params=pltpu.CompilerParams(
            dimension_semantics=("parallel",)),              # shard batch tiles over TCs
    )(x_pad, HW, U_pad)

    return z_pad[:B, :V_count]


if __name__ == "__main__":
    key = jax.random.PRNGKey(0)
    k_h, k_w, k_u, k_idx = jax.random.split(key, 4)

    # Deterministic parameter init (mirrors torch.randn shapes in __init__).
    H = jax.random.normal(k_h, (one_hot_len, h_n), dtype=jnp.float32)
    W = jax.random.normal(k_w, (one_hot_len, V_count), dtype=jnp.float32)
    U = jax.random.normal(k_u, (h_n, V_count), dtype=jnp.float32)

    # Synthetic one-hot context inputs: (B, n-1, V_count) = (16, 2, 7).
    B = 16
    idx = jax.random.randint(k_idx, (B, n - 1), 0, V_count)
    inp = jax.nn.one_hot(idx, V_count, dtype=jnp.float32)

    z = jax.block_until_ready(nnlm_forward(inp, H, W, U))

    # Pure-JAX reference check of the forward semantics.
    x_ref = inp.reshape(-1, one_hot_len)
    z_ref = x_ref @ W + jnp.tanh(x_ref @ H) @ U
    assert z.shape == (B, V_count)
    assert jnp.allclose(z, z_ref, atol=1e-5, rtol=1e-5)

    print("KERNEL_OK")
</pallas_src>

<mosaic_0001>
module attributes {stable_mosaic.version = 11 : i64} {
  func.func @nnlm_kernel(%arg0: i32, %arg1: memref<16x14xf32, #tpu.memory_space<vmem>>, %arg2: memref<14x256xf32, #tpu.memory_space<vmem>>, %arg3: memref<128x128xf32, #tpu.memory_space<vmem>>, %arg4: memref<16x128xf32, #tpu.memory_space<vmem>>) attributes {dimension_semantics = [#tpu.dimension_semantics<parallel>], iteration_bounds = array<i64: 1>, scalar_prefetch = 0 : i64, scratch_operands = 0 : i64, tpu.core_type = #tpu.core_type<tc>, window_params = [{transform_indices = @transform_0, window_bounds = array<i64: 16, 14>}, {pipeline_mode = #tpu.pipeline_mode<synchronous>, transform_indices = @transform_1, window_bounds = array<i64: 14, 256>}, {pipeline_mode = #tpu.pipeline_mode<synchronous>, transform_indices = @transform_2, window_bounds = array<i64: 128, 128>}, {transform_indices = @transform_3, window_bounds = array<i64: 16, 128>}]} {
    %c0 = arith.constant 0 : index
    %c0_0 = arith.constant 0 : index
    %0 = vector.load %arg1[%c0, %c0_0] : memref<16x14xf32, #tpu.memory_space<vmem>>, vector<16x14xf32>
    %c0_1 = arith.constant 0 : index
    %c0_2 = arith.constant 0 : index
    %1 = vector.load %arg2[%c0_1, %c0_2] : memref<14x256xf32, #tpu.memory_space<vmem>>, vector<14x256xf32>
    %cst = arith.constant dense<0.000000e+00> : vector<16x256xf32>
    %2 = tpu.matmul %0, %1, %cst {dimension_numbers = #tpu.dot_dimension_numbers<[1], [0], [0], [1], [0, 0, 1, 1], [], []>} : vector<16x14xf32>, vector<14x256xf32>, vector<16x256xf32> -> vector<16x256xf32>
    %3 = vector.extract_strided_slice %2 {offsets = [0, 0], sizes = [16, 128], strides = [1, 1]} : vector<16x256xf32> to vector<16x128xf32>
    %4 = math.tanh %3 : vector<16x128xf32>
    %5 = vector.extract_strided_slice %2 {offsets = [0, 128], sizes = [16, 128], strides = [1, 1]} : vector<16x256xf32> to vector<16x128xf32>
    %c0_3 = arith.constant 0 : index
    %c0_4 = arith.constant 0 : index
    %6 = vector.load %arg3[%c0_3, %c0_4] : memref<128x128xf32, #tpu.memory_space<vmem>>, vector<128x128xf32>
    %cst_5 = arith.constant dense<0.000000e+00> : vector<16x128xf32>
    %7 = tpu.matmul %4, %6, %cst_5 {dimension_numbers = #tpu.dot_dimension_numbers<[1], [0], [0], [1], [0, 0, 1, 1], [], []>} : vector<16x128xf32>, vector<128x128xf32>, vector<16x128xf32> -> vector<16x128xf32>
    %8 = arith.addf %5, %7 : vector<16x128xf32>
    %c0_6 = arith.constant 0 : index
    %c0_7 = arith.constant 0 : index
    %9 = vector.load %arg4[%c0_6, %c0_7] : memref<16x128xf32, #tpu.memory_space<vmem>>, vector<16x128xf32>
    tpu.vector_store %arg4[%c0_6, %c0_7], %8 {strides = array<i32>} : memref<16x128xf32, #tpu.memory_space<vmem>>, vector<16x128xf32>,
    return
  }
  func.func @transform_0(%arg0: i32) -> (i32, i32) {
    %c0_i32 = arith.constant 0 : i32
    %c0_i32_0 = arith.constant 0 : i32
    return %arg0, %c0_i32 : i32, i32
  }
  func.func @transform_1(%arg0: i32) -> (i32, i32) {
    %c0_i32 = arith.constant 0 : i32
    %c0_i32_0 = arith.constant 0 : i32
    %c0_i32_1 = arith.constant 0 : i32
    return %c0_i32, %c0_i32_0 : i32, i32
  }
  func.func @transform_2(%arg0: i32) -> (i32, i32) {
    %c0_i32 = arith.constant 0 : i32
    %c0_i32_0 = arith.constant 0 : i32
    %c0_i32_1 = arith.constant 0 : i32
    return %c0_i32, %c0_i32_0 : i32, i32
  }
  func.func @transform_3(%arg0: i32) -> (i32, i32) {
    %c0_i32 = arith.constant 0 : i32
    %c0_i32_0 = arith.constant 0 : i32
    return %arg0, %c0_i32 : i32, i32
  }
}

</mosaic_0001>

<llo_original>
// kernel: nnlm_forward.1
$region0: #{nnlm_forward.1}
  #allocation0 [shape = 'u32[]', space=smem, size = 0x4, offset = 0x4, fixed_abs, tag = 'smem constant byte address 0x4 - core index']
  #allocation1 [shape = 'u32[144,128]{1,0:T(1,128)}', space=vmem, size = 0x12000, scoped, tag = 'internal scratch']
  %s0 = inlined_call_operand.vmem [shape: f32[16,14], index: 0, kind: input, shape index: {}]
  %s1 = inlined_call_operand.vmem [shape: f32[14,256], index: 1, kind: input, shape index: {}]
  %s2 = inlined_call_operand.vmem [shape: f32[128,128], index: 2, kind: input, shape index: {}]
  %s3 = inlined_call_operand.vmem [shape: f32[16,128], index: 3, kind: output, shape index: {}]
  %s4 = sld [smem:[#allocation0]]
  $region22: #{nnlm_forward.1} parent=0
    _
  %s6 = ssub.s32 1, %s4
  %s7 = scalar_select 0, %s6, %s4
  // Predicated region
  $region2: #{nnlm_forward.1} parent=0 // pred_check
    _
  $region3: #{nnlm_forward.1} parent=0 // pred_check_branch
    %9 = sbr.rel (0) target = $region5
  $region4: #{nnlm_forward.1} parent=0 // pred_region
    _
  $region5: #{nnlm_forward.1} parent=0 // pred_fallthru
    _
  // Predicated region
  $region6: #{nnlm_forward.1} parent=0 // pred_check
    _
  $region7: #{nnlm_forward.1} parent=0 // pred_check_branch
    %11 = sbr.rel (0) target = $region9
  $region8: #{nnlm_forward.1} parent=0 // pred_region
    _
  $region9: #{nnlm_forward.1} parent=0 // pred_fallthru
    _
  // Predicated region
  $region10: #{nnlm_forward.1} parent=0 // pred_check
    _
  $region11: #{nnlm_forward.1} parent=0 // pred_check_branch
    %13 = sbr.rel (0) target = $region13
  $region12: #{nnlm_forward.1} parent=0 // pred_region
    _
  $region13: #{nnlm_forward.1} parent=0 // pred_fallthru
    _
  %v14 = vld [vmem:[%s0] sm:$0xff]
  %v15 = vld [vmem:[%s0 + $0x8] sm:$0xff]
  %v16 = vld [vmem:[%s1] sm:$0xff]
  %v17 = vld [vmem:[%s1 + $0x8] sm:$0xff]
  %v18 = vld [vmem:[%s1 + $0x10] sm:$0x3f]
  %v19 = vld [vmem:[%s1 + $0x18] sm:$0x3f]
  %vm20 = vcmask 113664
  %v22 = vsel %vm20, %v14, 0
  %v25 = vsel %vm20, %v15, 0
  %vm27 = vcmask 1045504
  %v29 = vsel %vm27, %v18, 0
  %v32 = vsel %vm27, %v19, 0
  %34 = vmatprep.subr.mxu0 %v17
  %35 = vmatpush1.msra.mxu0 %v16
  %36 = vmatprep.subr.mxu0 %v32
  %37 = vmatpush1.msra.mxu0 %v29
  %38 = vmatprep.subr.mxu0 0.0
  %39 = vmatpush1.msra.mxu0 0.0
  %40 = vmatprep.subr.mxu0 0.0
  %41 = vmatpush1.msra.mxu0 0.0
  %42 = vmatprep.subr.mxu0 0.0
  %43 = vmatpush1.msra.mxu0 0.0
  %44 = vmatprep.subr.mxu0 0.0
  %45 = vmatpush1.msra.mxu0 0.0
  %46 = vmatprep.subr.mxu0 0.0
  %47 = vmatpush1.msra.mxu0 0.0
  %48 = vmatprep.subr.mxu0 0.0
  %49 = vmatpush1.msra.mxu0 0.0
  %50 = vmatprep.subr.mxu0 0.0
  %51 = vmatpush1.msra.mxu0 0.0
  %52 = vmatprep.subr.mxu0 0.0
  %53 = vmatpush1.msra.mxu0 0.0
  %54 = vmatprep.subr.mxu0 0.0
  %55 = vmatpush1.msra.mxu0 0.0
  %56 = vmatprep.subr.mxu0 0.0
  %57 = vmatpush1.msra.mxu0 0.0
  %58 = vmatprep.subr.mxu0 0.0
  %59 = vmatpush1.msra.mxu0 0.0
  %60 = vmatprep.subr.mxu0 0.0
  %61 = vmatpush1.msra.mxu0 0.0
  %62 = vmatprep.subr.mxu0 0.0
  %63 = vmatpush1.msra.mxu0 0.0
  %64 = vmatprep.subr.mxu0 0.0
  %65 = vmatpush1.msra.mxu0 0.0
  %66 = vmatprep.subr.mxu0 0.0
  %67 = vmatpush1.msra.mxu0 0.0
  %68 = vmatprep.subr.mxu0 0.0
  %69 = vmatpush1.msra.mxu0 0.0
  %70 = vmatprep.subr.mxu0 0.0
  %71 = vmatpush1.msra.mxu0 0.0
  %72 = vmatprep.subr.mxu0 0.0
  %73 = vmatpush1.msra.mxu0 0.0
  %74 = vmatprep.subr.mxu0 0.0
  %75 = vmatpush1.msra.mxu0 0.0
  %76 = vmatprep.subr.mxu0 0.0
  %77 = vmatpush1.msra.mxu0 0.0
  %78 = vmatprep.subr.mxu0 0.0
  %79 = vmatpush1.msra.mxu0 0.0
  %80 = vmatprep.subr.mxu0 0.0
  %81 = vmatpush1.msra.mxu0 0.0
  %82 = vmatprep.subr.mxu0 0.0
  %83 = vmatpush1.msra.mxu0 0.0
  %84 = vmatprep.subr.mxu0 0.0
  %85 = vmatpush1.msra.mxu0 0.0
  %86 = vmatprep.subr.mxu0 0.0
  %87 = vmatpush1.msra.mxu0 0.0
  %88 = vmatprep.subr.mxu0 0.0
  %89 = vmatpush1.msra.mxu0 0.0
  %90 = vmatprep.subr.mxu0 0.0
  %91 = vmatpush1.msra.mxu0 0.0
  %92 = vmatprep.subr.mxu0 0.0
  %93 = vmatpush1.msra.mxu0 0.0
  %94 = vmatprep.subr.mxu0 0.0
  %95 = vmatpush1.msra.mxu0 0.0
  %96 = vmatprep.subr.mxu0 0.0
  %97 = vmatpush1.msra.mxu0 0.0
  %98 = vmatprep.mubr.f32.mxu0 0.0
  %99 = vmatmul.mubr.f32.gmra.mrb[0].mxu0 %v22
  %v100 = vpop.f32.mrb[0].mxu0
  %v101 = vadd.f32 0.0, %v100
  %v102 = vpop.f32.mrb[0].mxu0
  %v103 = vadd.f32 0.0, %v102
  %104 = vmatprep.mubr.f32.mxu0 0.0
  %105 = vmatmul.mubr.f32.gmra.mrb[0].mxu0 %v25
  %v106 = vpop.f32.mrb[0].mxu0
  %v107 = vadd.f32 0.0, %v106
  %v108 = vpop.f32.mrb[0].mxu0
  %v109 = vadd.f32 0.0, %v108
  %110 = vdwg.mxu0
  %v111 = vtanh.pop %v101
  %v112 = vtanh.pop %v107
  %v113 = vld [vmem:[%s2] sm:$0xff]
  %v114 = vld [vmem:[%s2 + $0x8] sm:$0xff]
  %v115 = vld [vmem:[%s2 + $0x10] sm:$0xff]
  %v116 = vld [vmem:[%s2 + $0x18] sm:$0xff]
  %v117 = vld [vmem:[%s2 + $0x20] sm:$0xff]
  %v118 = vld [vmem:[%s2 + $0x28] sm:$0xff]
  %v119 = vld [vmem:[%s2 + $0x30] sm:$0xff]
  %v120 = vld [vmem:[%s2 + $0x38] sm:$0xff]
  %v121 = vld [vmem:[%s2 + $0x40] sm:$0xff]
  %v122 = vld [vmem:[%s2 + $0x48] sm:$0xff]
  %v123 = vld [vmem:[%s2 + $0x50] sm:$0xff]
  %v124 = vld [vmem:[%s2 + $0x58] sm:$0xff]
  %v125 = vld [vmem:[%s2 + $0x60] sm:$0xff]
  %v126 = vld [vmem:[%s2 + $0x68] sm:$0xff]
  %v127 = vld [vmem:[%s2 + $0x70] sm:$0xff]
  %v128 = vld [vmem:[%s2 + $0x78] sm:$0xff]
  %129 = vmatprep.subr.mxu0 0.0
  %130 = vmatpush1.msra.mxu0 %v113
  %131 = vmatprep.subr.mxu0 0.0
  %132 = vmatpush1.msra.mxu0 %v114
  %133 = vmatprep.subr.mxu0 0.0
  %134 = vmatpush1.msra.mxu0 %v115
  %135 = vmatprep.subr.mxu0 0.0
  %136 = vmatpush1.msra.mxu0 %v116
  %137 = vmatprep.subr.mxu0 0.0
  %138 = vmatpush1.msra.mxu0 %v117
  %139 = vmatprep.subr.mxu0 0.0
  %140 = vmatpush1.msra.mxu0 %v118
  %141 = vmatprep.subr.mxu0 0.0
  %142 = vmatpush1.msra.mxu0 %v119
  %143 = vmatprep.subr.mxu0 0.0
  %144 = vmatpush1.msra.mxu0 %v120
  %145 = vmatprep.subr.mxu0 0.0
  %146 = vmatpush1.msra.mxu0 %v121
  %147 = vmatprep.subr.mxu0 0.0
  %148 = vmatpush1.msra.mxu0 %v122
  %149 = vmatprep.subr.mxu0 0.0
  %150 = vmatpush1.msra.mxu0 %v123
  %151 = vmatprep.subr.mxu0 0.0
  %152 = vmatpush1.msra.mxu0 %v124
  %153 = vmatprep.subr.mxu0 0.0
  %154 = vmatpush1.msra.mxu0 %v125
  %155 = vmatprep.subr.mxu0 0.0
  %156 = vmatpush1.msra.mxu0 %v126
  %157 = vmatprep.subr.mxu0 0.0
  %158 = vmatpush1.msra.mxu0 %v127
  %159 = vmatprep.subr.mxu0 0.0
  %160 = vmatpush1.msra.mxu0 %v128
  %161 = vmatprep.subr.mxu0 0.0
  %162 = vmatpush1.msra.mxu0 0.0
  %163 = vmatprep.subr.mxu0 0.0
  %164 = vmatpush1.msra.mxu0 0.0
  %165 = vmatprep.subr.mxu0 0.0
  %166 = vmatpush1.msra.mxu0 0.0
  %167 = vmatprep.subr.mxu0 0.0
  %168 = vmatpush1.msra.mxu0 0.0
  %169 = vmatprep.subr.mxu0 0.0
  %170 = vmatpush1.msra.mxu0 0.0
  %171 = vmatprep.subr.mxu0 0.0
  %172 = vmatpush1.msra.mxu0 0.0
  %173 = vmatprep.subr.mxu0 0.0
  %174 = vmatpush1.msra.mxu0 0.0
  %175 = vmatprep.subr.mxu0 0.0
  %176 = vmatpush1.msra.mxu0 0.0
  %177 = vmatprep.subr.mxu0 0.0
  %178 = vmatpush1.msra.mxu0 0.0
  %179 = vmatprep.subr.mxu0 0.0
  %180 = vmatpush1.msra.mxu0 0.0
  %181 = vmatprep.subr.mxu0 0.0
  %182 = vmatpush1.msra.mxu0 0.0
  %183 = vmatprep.subr.mxu0 0.0
  %184 = vmatpush1.msra.mxu0 0.0
  %185 = vmatprep.subr.mxu0 0.0
  %186 = vmatpush1.msra.mxu0 0.0
  %187 = vmatprep.subr.mxu0 0.0
  %188 = vmatpush1.msra.mxu0 0.0
  %189 = vmatprep.subr.mxu0 0.0
  %190 = vmatpush1.msra.mxu0 0.0
  %191 = vmatprep.subr.mxu0 0.0
  %192 = vmatpush1.msra.mxu0 0.0
  %193 = vmatprep.mubr.f32.mxu0 0.0
  %194 = vmatmul.mubr.f32.gmra.mrb[0].mxu0 %v111
  %v195 = vpop.f32.mrb[0].mxu0
  %v196 = vadd.f32 0.0, %v195
  %v197 = vpop.f32.mrb[0].mxu0
  %198 = vmatprep.mubr.f32.mxu0 0.0
  %199 = vmatmul.mubr.f32.gmra.mrb[0].mxu0 %v112
  %v200 = vpop.f32.mrb[0].mxu0
  %v201 = vadd.f32 0.0, %v200
  %v202 = vpop.f32.mrb[0].mxu0
  %203 = vdwg.mxu0
  %v204 = vadd.f32 %v103, %v196
  %v205 = vadd.f32 %v109, %v201
  %206 = vst [vmem:[%s3] sm:$0xff] %v204
  %207 = vst [vmem:[%s3 + $0x8] sm:$0xff] %v205
  // Predicated region
  $region14: #{nnlm_forward.1} parent=0 // pred_check
    _
  $region15: #{nnlm_forward.1} parent=0 // pred_check_branch
    %209 = sbr.rel (0) target = $region17
  $region16: #{nnlm_forward.1} parent=0 // pred_region
    _
  $region17: #{nnlm_forward.1} parent=0 // pred_fallthru
    _
  // Predicated region
  $region18: #{nnlm_forward.1} parent=0 // pred_check
    _
  $region19: #{nnlm_forward.1} parent=0 // pred_check_branch
    %211 = sbr.rel (0) target = $region21
  $region20: #{nnlm_forward.1} parent=0 // pred_region
    _
  $region21: #{nnlm_forward.1} parent=0 // pred_fallthru
    _

</llo_original>
